<compile_context>
chip_gen: v6e
topology: v6e:2x2x1
jax: 0.10.0
libtpu: 0.0.40
codegen_flags: <defaults>
</compile_context>

<pallas_src>
import jax
import jax.numpy as jnp
from jax import lax
from jax.experimental import pallas as pl
from jax.experimental.pallas import tpu as pltpu  # noqa: F401  (kept for parity / future tiling)


def _linear_kernel(x_ref, w_ref, o_ref):
    """Single-shot y = x @ w.T  with x:[B,K], w:[N,K], o:[B,N]."""
    o_ref[...] = lax.dot_general(
        x_ref[...],
        w_ref[...],
        dimension_numbers=(((1,), (1,)), ((), ())),  # contract K (x axis 1) with K (w axis 1)
        preferred_element_type=jnp.float32,
    ).astype(o_ref.dtype)


def linear_forward(x, weight):
    """y = x @ weight.T (no bias), matching nn.Linear(in_features, out_features, bias=False).

    Args:
      x:      [B, K] float32
      weight: [N, K] float32  (PyTorch nn.Linear.weight layout, untouched)
    Returns:
      y:      [B, N] float32
    """
    B, K = x.shape
    N, K2 = weight.shape
    assert K == K2, "in_features mismatch between x and weight"

    return pl.pallas_call(
        _linear_kernel,
        out_shape=jax.ShapeDtypeStruct((B, N), x.dtype),
        # No grid: one invocation, full-array blocks resident in VMEM.
        in_specs=[
            pl.BlockSpec((B, K), lambda: (0, 0)),
            pl.BlockSpec((N, K), lambda: (0, 0)),
        ],
        out_specs=pl.BlockSpec((B, N), lambda: (0, 0)),
        cost_estimate=pl.CostEstimate(
            flops=2 * B * K * N,
            transcendentals=0,
            bytes_accessed=(B * K + N * K + B * N) * x.dtype.itemsize,
        ),
    )(x, weight)


if __name__ == "__main__":
    # Model config (matches LinearModel defaults): in=768, out=32, bias=False
    in_features = 768
    out_features = 32
    batch = 8
    sigma = 1.0

    key = jax.random.PRNGKey(0)
    kx, kw = jax.random.split(key)

    # Deterministic parameter init: normal(mean=0, std=sigma), PyTorch weight layout.
    weight = sigma * jax.random.normal(
        kw, (out_features, in_features), dtype=jnp.float32
    )
    x = jax.random.normal(kx, (batch, in_features), dtype=jnp.float32)

    y = linear_forward(x, weight)
    y = jax.block_until_ready(y)

    # Sanity check against plain-JAX reference.
    y_ref = x @ weight.T
    assert y.shape == (batch, out_features)
    assert jnp.allclose(y, y_ref, atol=1e-4, rtol=1e-4)

    print("KERNEL_OK")
</pallas_src>

<mosaic_0001>
module attributes {stable_mosaic.version = 11 : i64} {
  func.func @_linear_kernel(%arg0: memref<8x768xf32, #tpu.memory_space<vmem>>, %arg1: memref<32x768xf32, #tpu.memory_space<vmem>>, %arg2: memref<8x32xf32, #tpu.memory_space<vmem>>) attributes {dimension_semantics = [], scalar_prefetch = 0 : i64, scratch_operands = 0 : i64, tpu.core_type = #tpu.core_type<tc>} {
    %c0 = arith.constant 0 : index
    %c0_0 = arith.constant 0 : index
    %0 = vector.load %arg0[%c0, %c0_0] : memref<8x768xf32, #tpu.memory_space<vmem>>, vector<8x768xf32>
    %c0_1 = arith.constant 0 : index
    %c0_2 = arith.constant 0 : index
    %1 = vector.load %arg1[%c0_1, %c0_2] : memref<32x768xf32, #tpu.memory_space<vmem>>, vector<32x768xf32>
    %cst = arith.constant dense<0.000000e+00> : vector<8x32xf32>
    %2 = tpu.matmul %0, %1, %cst {dimension_numbers = #tpu.dot_dimension_numbers<[1], [1], [0], [0], [0, 0, 1, 0], [], []>} : vector<8x768xf32>, vector<32x768xf32>, vector<8x32xf32> -> vector<8x32xf32>
    %c0_3 = arith.constant 0 : index
    %c0_4 = arith.constant 0 : index
    %3 = vector.load %arg2[%c0_3, %c0_4] : memref<8x32xf32, #tpu.memory_space<vmem>>, vector<8x32xf32>
    tpu.vector_store %arg2[%c0_3, %c0_4], %2 {strides = array<i32>} : memref<8x32xf32, #tpu.memory_space<vmem>>, vector<8x32xf32>,
    return
  }
}

</mosaic_0001>

<llo_original>
// kernel: tpu_custom_call.1
$region0: #{tpu_custom_call.1}
  #allocation0 [shape = 'u32[]', space=smem, size = 0x4, offset = 0x4, fixed_abs, tag = 'smem constant byte address 0x4 - core index']
  #allocation1 [shape = 'u32[144,128]{1,0:T(1,128)}', space=vmem, size = 0x12000, scoped, tag = 'internal scratch']
  %s0 = inlined_call_operand.hbm [shape: f32[8,768], index: 0, kind: input, shape index: {}]
  %s1 = inlined_call_operand.hbm [shape: f32[32,768], index: 1, kind: input, shape index: {}]
  %s2 = inlined_call_operand.hbm [shape: f32[8,32], index: 2, kind: output, shape index: {}]
  %s3 = sld [smem:[#allocation0]]
  $region26: #{tpu_custom_call.1} parent=0
    _
  %s5 = ssub.s32 1, %s3
  %s6 = scalar_select 0, %s5, %s3
  $region1: #{tpu_custom_call.1} parent=0
    #allocation2 [shape = 'u8[24576]{0}', space=vmem, size = 0x6000, scoped, tag = 'input window, operand 0, single buffered']
    #allocation3 [shape = 's32[1]{0}', space=sflag, size = 0x4, scoped, tag = 'scoped memory for tpu_custom_call.1']
    #allocation4 [shape = 's32[1]{0}', space=sflag, size = 0x4, scoped, tag = 'scoped memory for tpu_custom_call.1']
    #allocation5 [shape = 'u8[98304]{0}', space=vmem, size = 0x18000, scoped, tag = 'input window, operand 1, single buffered']
    #allocation6 [shape = 's32[1]{0}', space=sflag, size = 0x4, scoped, tag = 'scoped memory for tpu_custom_call.1']
    #allocation7 [shape = 'u8[4096]{0}', space=vmem, size = 0x1000, scoped, tag = 'output window, operand 0, single buffered']
    %7 = vsyncpa [#allocation3], 0
    %8 = vsyncpa [#allocation6], 0
    %9 = vsyncpa [#allocation4], 0
    // Predicated region
    $region2: #{tpu_custom_call.1} parent=1 // pred_check
      _
    $region3: #{tpu_custom_call.1} parent=1 // pred_check_branch
      %11 = sbr.rel (0) target = $region5
    $region4: #{tpu_custom_call.1} parent=1 // pred_region
      %s13 = ssub.s32 768, 768
      %14 = vsyncadd [#allocation3], %s13
      %s16 = sshll.u32 [#allocation2], 4
      %s17 = int_to_ptr.vmem [resolvable:$true] %s16
      %19 = dma.hbm_to_vmem [thread:$0]  %s0, 768, %s17, [#allocation3]
    $region5: #{tpu_custom_call.1} parent=1 // pred_fallthru
      _
    // Predicated region
    $region6: #{tpu_custom_call.1} parent=1 // pred_check
      _
    $region7: #{tpu_custom_call.1} parent=1 // pred_check_branch
      %21 = sbr.rel (0) target = $region9
    $region8: #{tpu_custom_call.1} parent=1 // pred_region
      %s23 = ssub.s32 3072, 3072
      %24 = vsyncadd [#allocation6], %s23
      %s25 = sshll.u32 [#allocation5], 4
      %s26 = int_to_ptr.vmem [resolvable:$true] %s25
      %31 = dma.hbm_to_vmem [thread:$0]  %s1, 3072, %s26, [#allocation6], 768, 768, 48
    $region9: #{tpu_custom_call.1} parent=1 // pred_fallthru
      _
    // Predicated region
    $region10: #{tpu_custom_call.1} parent=1 // pred_check
      _
    $region11: #{tpu_custom_call.1} parent=1 // pred_check_branch
      %33 = sbr.rel (0) target = $region13
    $region12: #{tpu_custom_call.1} parent=1 // pred_region
      %34 = dma.done [#allocation3], 768
    $region13: #{tpu_custom_call.1} parent=1 // pred_fallthru
      _
    // Predicated region
    $region14: #{tpu_custom_call.1} parent=1 // pred_check
      _
    $region15: #{tpu_custom_call.1} parent=1 // pred_check_branch
      %36 = sbr.rel (0) target = $region17
    $region16: #{tpu_custom_call.1} parent=1 // pred_region
      %37 = dma.done [#allocation6], 3072
    $region17: #{tpu_custom_call.1} parent=1 // pred_fallthru
      _
    %v38 = vld [vmem:[#allocation2] sm:$0xff]
    %v39 = vld [vmem:[#allocation2 + $0x8] sm:$0xff]
    %v40 = vld [vmem:[#allocation2 + $0x10] sm:$0xff]
    %v41 = vld [vmem:[#allocation2 + $0x18] sm:$0xff]
    %v42 = vld [vmem:[#allocation2 + $0x20] sm:$0xff]
    %v43 = vld [vmem:[#allocation2 + $0x28] sm:$0xff]
    %v44 = vld [vmem:[#allocation5] sm:$0xff]
    %v45 = vld [vmem:[#allocation5 + $0x8] sm:$0xff]
    %v46 = vld [vmem:[#allocation5 + $0x10] sm:$0xff]
    %v47 = vld [vmem:[#allocation5 + $0x18] sm:$0xff]
    %v48 = vld [vmem:[#allocation5 + $0x20] sm:$0xff]
    %v49 = vld [vmem:[#allocation5 + $0x28] sm:$0xff]
    %v50 = vld [vmem:[#allocation5 + $0x30] sm:$0xff]
    %v51 = vld [vmem:[#allocation5 + $0x38] sm:$0xff]
    %v52 = vld [vmem:[#allocation5 + $0x40] sm:$0xff]
    %v53 = vld [vmem:[#allocation5 + $0x48] sm:$0xff]
    %v54 = vld [vmem:[#allocation5 + $0x50] sm:$0xff]
    %v55 = vld [vmem:[#allocation5 + $0x58] sm:$0xff]
    %v56 = vld [vmem:[#allocation5 + $0x60] sm:$0xff]
    %v57 = vld [vmem:[#allocation5 + $0x68] sm:$0xff]
    %v58 = vld [vmem:[#allocation5 + $0x70] sm:$0xff]
    %v59 = vld [vmem:[#allocation5 + $0x78] sm:$0xff]
    %v60 = vld [vmem:[#allocation5 + $0x80] sm:$0xff]
    %v61 = vld [vmem:[#allocation5 + $0x88] sm:$0xff]
    %v62 = vld [vmem:[#allocation5 + $0x90] sm:$0xff]
    %v63 = vld [vmem:[#allocation5 + $0x98] sm:$0xff]
    %v64 = vld [vmem:[#allocation5 + $0xa0] sm:$0xff]
    %v65 = vld [vmem:[#allocation5 + $0xa8] sm:$0xff]
    %v66 = vld [vmem:[#allocation5 + $0xb0] sm:$0xff]
    %v67 = vld [vmem:[#allocation5 + $0xb8] sm:$0xff]
    %68 = vmatprep.subr.mxu0 0.0
    %69 = vmatpush1.xpose.msra.mxu0 0.0
    %70 = vmatprep.subr.mxu0 0.0
    %71 = vmatpush1.xpose.msra.mxu0 0.0
    %72 = vmatprep.subr.mxu0 0.0
    %73 = vmatpush1.xpose.msra.mxu0 0.0
    %74 = vmatprep.subr.mxu0 0.0
    %75 = vmatpush1.xpose.msra.mxu0 0.0
    %76 = vmatprep.subr.mxu0 0.0
    %77 = vmatpush1.xpose.msra.mxu0 0.0
    %78 = vmatprep.subr.mxu0 0.0
    %79 = vmatpush1.xpose.msra.mxu0 0.0
    %80 = vmatprep.subr.mxu0 0.0
    %81 = vmatpush1.xpose.msra.mxu0 0.0
    %82 = vmatprep.subr.mxu0 0.0
    %83 = vmatpush1.xpose.msra.mxu0 0.0
    %84 = vmatprep.subr.mxu0 0.0
    %85 = vmatpush1.xpose.msra.mxu0 0.0
    %86 = vmatprep.subr.mxu0 0.0
    %87 = vmatpush1.xpose.msra.mxu0 0.0
    %88 = vmatprep.subr.mxu0 0.0
    %89 = vmatpush1.xpose.msra.mxu0 0.0
    %90 = vmatprep.subr.mxu0 0.0
    %91 = vmatpush1.xpose.msra.mxu0 0.0
    %92 = vmatprep.subr.mxu0 %v63
    %93 = vmatpush1.xpose.msra.mxu0 %v62
    %94 = vmatprep.subr.mxu0 %v57
    %95 = vmatpush1.xpose.msra.mxu0 %v56
    %96 = vmatprep.subr.mxu0 %v51
    %97 = vmatpush1.xpose.msra.mxu0 %v50
    %98 = vmatprep.subr.mxu0 %v45
    %99 = vmatpush1.xpose.msra.mxu0 %v44
    %100 = vmatprep.subr.mxu0 0.0
    %101 = vmatpush2.xpose.msra.mxu0 0.0
    %102 = vmatprep.subr.mxu0 0.0
    %103 = vmatpush2.xpose.msra.mxu0 0.0
    %104 = vmatprep.subr.mxu0 0.0
    %105 = vmatpush2.xpose.msra.mxu0 0.0
    %106 = vmatprep.subr.mxu0 0.0
    %107 = vmatpush2.xpose.msra.mxu0 0.0
    %108 = vmatprep.subr.mxu0 0.0
    %109 = vmatpush2.xpose.msra.mxu0 0.0
    %110 = vmatprep.subr.mxu0 0.0
    %111 = vmatpush2.xpose.msra.mxu0 0.0
    %112 = vmatprep.subr.mxu0 0.0
    %113 = vmatpush2.xpose.msra.mxu0 0.0
    %114 = vmatprep.subr.mxu0 0.0
    %115 = vmatpush2.xpose.msra.mxu0 0.0
    %116 = vmatprep.subr.mxu0 0.0
    %117 = vmatpush2.xpose.msra.mxu0 0.0
    %118 = vmatprep.subr.mxu0 0.0
    %119 = vmatpush2.xpose.msra.mxu0 0.0
    %120 = vmatprep.subr.mxu0 0.0
    %121 = vmatpush2.xpose.msra.mxu0 0.0
    %122 = vmatprep.subr.mxu0 0.0
    %123 = vmatpush2.xpose.msra.mxu0 0.0
    %124 = vmatprep.subr.mxu0 0.0
    %125 = vmatpush2.xpose.msra.mxu0 0.0
    %126 = vmatprep.subr.mxu0 0.0
    %127 = vmatpush2.xpose.msra.mxu0 0.0
    %128 = vmatprep.subr.mxu0 0.0
    %129 = vmatpush2.xpose.msra.mxu0 0.0
    %130 = vmatprep.subr.mxu0 0.0
    %131 = vmatpush2.xpose.msra.mxu0 0.0
    %132 = vmatprep.mubr.f32.mxu0 %v39
    %133 = vmatmul.mubr.f32.gmra.mxu0 %v38
    %v134 = vpop.f32.mrf.mxu0
    %v135 = vadd.f32 0.0, %v134
    %v136 = vpop.f32.mrf.mxu0
    %137 = vdwg.mxu0
    %138 = vmatprep.subr.mxu0 0.0
    %139 = vmatpush1.xpose.msra.mxu0 0.0
    %140 = vmatprep.subr.mxu0 0.0
    %141 = vmatpush1.xpose.msra.mxu0 0.0
    %142 = vmatprep.subr.mxu0 0.0
    %143 = vmatpush1.xpose.msra.mxu0 0.0
    %144 = vmatprep.subr.mxu0 0.0
    %145 = vmatpush1.xpose.msra.mxu0 0.0
    %146 = vmatprep.subr.mxu0 0.0
    %147 = vmatpush1.xpose.msra.mxu0 0.0
    %148 = vmatprep.subr.mxu0 0.0
    %149 = vmatpush1.xpose.msra.mxu0 0.0
    %150 = vmatprep.subr.mxu0 0.0
    %151 = vmatpush1.xpose.msra.mxu0 0.0
    %152 = vmatprep.subr.mxu0 0.0
    %153 = vmatpush1.xpose.msra.mxu0 0.0
    %154 = vmatprep.subr.mxu0 0.0
    %155 = vmatpush1.xpose.msra.mxu0 0.0
    %156 = vmatprep.subr.mxu0 0.0
    %157 = vmatpush1.xpose.msra.mxu0 0.0
    %158 = vmatprep.subr.mxu0 0.0
    %159 = vmatpush1.xpose.msra.mxu0 0.0
    %160 = vmatprep.subr.mxu0 0.0
    %161 = vmatpush1.xpose.msra.mxu0 0.0
    %162 = vmatprep.subr.mxu0 %v65
    %163 = vmatpush1.xpose.msra.mxu0 %v64
    %164 = vmatprep.subr.mxu0 %v59
    %165 = vmatpush1.xpose.msra.mxu0 %v58
    %166 = vmatprep.subr.mxu0 %v53
    %167 = vmatpush1.xpose.msra.mxu0 %v52
    %168 = vmatprep.subr.mxu0 %v47
    %169 = vmatpush1.xpose.msra.mxu0 %v46
    %170 = vmatprep.subr.mxu0 0.0
    %171 = vmatpush2.xpose.msra.mxu0 0.0
    %172 = vmatprep.subr.mxu0 0.0
    %173 = vmatpush2.xpose.msra.mxu0 0.0
    %174 = vmatprep.subr.mxu0 0.0
    %175 = vmatpush2.xpose.msra.mxu0 0.0
    %176 = vmatprep.subr.mxu0 0.0
    %177 = vmatpush2.xpose.msra.mxu0 0.0
    %178 = vmatprep.subr.mxu0 0.0
    %179 = vmatpush2.xpose.msra.mxu0 0.0
    %180 = vmatprep.subr.mxu0 0.0
    %181 = vmatpush2.xpose.msra.mxu0 0.0
    %182 = vmatprep.subr.mxu0 0.0
    %183 = vmatpush2.xpose.msra.mxu0 0.0
    %184 = vmatprep.subr.mxu0 0.0
    %185 = vmatpush2.xpose.msra.mxu0 0.0
    %186 = vmatprep.subr.mxu0 0.0
    %187 = vmatpush2.xpose.msra.mxu0 0.0
    %188 = vmatprep.subr.mxu0 0.0
    %189 = vmatpush2.xpose.msra.mxu0 0.0
    %190 = vmatprep.subr.mxu0 0.0
    %191 = vmatpush2.xpose.msra.mxu0 0.0
    %192 = vmatprep.subr.mxu0 0.0
    %193 = vmatpush2.xpose.msra.mxu0 0.0
    %194 = vmatprep.subr.mxu0 0.0
    %195 = vmatpush2.xpose.msra.mxu0 0.0
    %196 = vmatprep.subr.mxu0 0.0
    %197 = vmatpush2.xpose.msra.mxu0 0.0
    %198 = vmatprep.subr.mxu0 0.0
    %199 = vmatpush2.xpose.msra.mxu0 0.0
    %200 = vmatprep.subr.mxu0 0.0
    %201 = vmatpush2.xpose.msra.mxu0 0.0
    %202 = vmatprep.mubr.f32.mxu0 %v41
    %203 = vmatmul.mubr.f32.gmra.mxu0 %v40
    %v204 = vpop.f32.mrf.mxu0
    %v205 = vadd.f32 %v135, %v204
    %v206 = vpop.f32.mrf.mxu0
    %207 = vdwg.mxu0
    %208 = vmatprep.subr.mxu0 0.0
    %209 = vmatpush1.xpose.msra.mxu0 0.0
    %210 = vmatprep.subr.mxu0 0.0
    %211 = vmatpush1.xpose.msra.mxu0 0.0
    %212 = vmatprep.subr.mxu0 0.0
    %213 = vmatpush1.xpose.msra.mxu0 0.0
    %214 = vmatprep.subr.mxu0 0.0
    %215 = vmatpush1.xpose.msra.mxu0 0.0
    %216 = vmatprep.subr.mxu0 0.0
    %217 = vmatpush1.xpose.msra.mxu0 0.0
    %218 = vmatprep.subr.mxu0 0.0
    %219 = vmatpush1.xpose.msra.mxu0 0.0
    %220 = vmatprep.subr.mxu0 0.0
    %221 = vmatpush1.xpose.msra.mxu0 0.0
    %222 = vmatprep.subr.mxu0 0.0
    %223 = vmatpush1.xpose.msra.mxu0 0.0
    %224 = vmatprep.subr.mxu0 0.0
    %225 = vmatpush1.xpose.msra.mxu0 0.0
    %226 = vmatprep.subr.mxu0 0.0
    %227 = vmatpush1.xpose.msra.mxu0 0.0
    %228 = vmatprep.subr.mxu0 0.0
    %229 = vmatpush1.xpose.msra.mxu0 0.0
    %230 = vmatprep.subr.mxu0 0.0
    %231 = vmatpush1.xpose.msra.mxu0 0.0
    %232 = vmatprep.subr.mxu0 %v67
    %233 = vmatpush1.xpose.msra.mxu0 %v66
    %234 = vmatprep.subr.mxu0 %v61
    %235 = vmatpush1.xpose.msra.mxu0 %v60
    %236 = vmatprep.subr.mxu0 %v55
    %237 = vmatpush1.xpose.msra.mxu0 %v54
    %238 = vmatprep.subr.mxu0 %v49
    %239 = vmatpush1.xpose.msra.mxu0 %v48
    %240 = vmatprep.subr.mxu0 0.0
    %241 = vmatpush2.xpose.msra.mxu0 0.0
    %242 = vmatprep.subr.mxu0 0.0
    %243 = vmatpush2.xpose.msra.mxu0 0.0
    %244 = vmatprep.subr.mxu0 0.0
    %245 = vmatpush2.xpose.msra.mxu0 0.0
    %246 = vmatprep.subr.mxu0 0.0
    %247 = vmatpush2.xpose.msra.mxu0 0.0
    %248 = vmatprep.subr.mxu0 0.0
    %249 = vmatpush2.xpose.msra.mxu0 0.0
    %250 = vmatprep.subr.mxu0 0.0
    %251 = vmatpush2.xpose.msra.mxu0 0.0
    %252 = vmatprep.subr.mxu0 0.0
    %253 = vmatpush2.xpose.msra.mxu0 0.0
    %254 = vmatprep.subr.mxu0 0.0
    %255 = vmatpush2.xpose.msra.mxu0 0.0
    %256 = vmatprep.subr.mxu0 0.0
    %257 = vmatpush2.xpose.msra.mxu0 0.0
    %258 = vmatprep.subr.mxu0 0.0
    %259 = vmatpush2.xpose.msra.mxu0 0.0
    %260 = vmatprep.subr.mxu0 0.0
    %261 = vmatpush2.xpose.msra.mxu0 0.0
    %262 = vmatprep.subr.mxu0 0.0
    %263 = vmatpush2.xpose.msra.mxu0 0.0
    %264 = vmatprep.subr.mxu0 0.0
    %265 = vmatpush2.xpose.msra.mxu0 0.0
    %266 = vmatprep.subr.mxu0 0.0
    %267 = vmatpush2.xpose.msra.mxu0 0.0
    %268 = vmatprep.subr.mxu0 0.0
    %269 = vmatpush2.xpose.msra.mxu0 0.0
    %270 = vmatprep.subr.mxu0 0.0
    %271 = vmatpush2.xpose.msra.mxu0 0.0
    %272 = vmatprep.mubr.f32.mxu0 %v43
    %273 = vmatmul.mubr.f32.gmra.mxu0 %v42
    %v274 = vpop.f32.mrf.mxu0
    %v275 = vadd.f32 %v205, %v274
    %v276 = vpop.f32.mrf.mxu0
    %277 = vdwg.mxu0
    %vm278 = vcmask 261120
    %279 = vst.msk [vmem:[#allocation7] sm:$0xff] %vm278, %v275
    // Predicated region
    $region18: #{tpu_custom_call.1} parent=1 // pred_check
      _
    $region19: #{tpu_custom_call.1} parent=1 // pred_check_branch
      %281 = sbr.rel (0) target = $region21
    $region20: #{tpu_custom_call.1} parent=1 // pred_region
      %s283 = ssub.s32 128, 128
      %284 = vsyncadd [#allocation4], %s283
      %s286 = sshll.u32 [#allocation7], 4
      %s287 = int_to_ptr.vmem [resolvable:$true] %s286
      %289 = dma.vmem_to_hbm [thread:$0]  %s287, 128, %s2, [#allocation4]
    $region21: #{tpu_custom_call.1} parent=1 // pred_fallthru
      _
    // Predicated region
    $region22: #{tpu_custom_call.1} parent=1 // pred_check
      _
    $region23: #{tpu_custom_call.1} parent=1 // pred_check_branch
      %291 = sbr.rel (0) target = $region25
    $region24: #{tpu_custom_call.1} parent=1 // pred_region
      %292 = dma.done [#allocation4], 128
    $region25: #{tpu_custom_call.1} parent=1 // pred_fallthru
      _
    %293 = vsyncpa [#allocation3], 1
    %294 = vsyncpa [#allocation6], 1
    %295 = vsyncpa [#allocation4], 1

</llo_original>
